<compile_context>
chip_gen: v6e
topology: v6e:2x2x1
jax: 0.10.0
libtpu: 0.0.40
codegen_flags: <defaults>
</compile_context>

<pallas_src>
import math

import numpy as np
import jax
import jax.numpy as jnp
from jax.experimental import pallas as pl
from jax.experimental.pallas import tpu as pltpu


# ----------------------------------------------------------------------------
# Gaussian weights (matches the PyTorch module __init__)
# ----------------------------------------------------------------------------
def gaussian_weights(channels, kernel_size, sigma, dim=2):
    """Returns (channels, K, K) float32, matching the PyTorch buffer (C,1,K,K)
    with the singleton in-channel axis dropped."""
    ks = [kernel_size] * dim if isinstance(kernel_size, int) else list(kernel_size)
    sg = [sigma] * dim if isinstance(sigma, (int, float)) else list(sigma)
    grids = jnp.meshgrid(*[jnp.arange(s, dtype=jnp.float32) for s in ks], indexing="ij")
    kernel = jnp.ones((), jnp.float32)
    for size, std, mgrid in zip(ks, sg, grids):
        mean = (size - 1) / 2.0
        kernel = kernel * (
            1.0 / (std * math.sqrt(2.0 * math.pi))
            * jnp.exp(-(((mgrid - mean) / std) ** 2) / 2.0)
        )
    kernel = kernel / jnp.sum(kernel)
    return jnp.tile(kernel[None, :, :], (channels, 1, 1))


# ----------------------------------------------------------------------------
# Constant operators: reflect padding + 1-D conv folded into band matrices
# ----------------------------------------------------------------------------
def _reflect_index(j, n):
    if j < 0:
        return -j
    if j >= n:
        return 2 * n - 2 - j
    return j


def _band_matrix(n, taps, p):
    """(n, n) operator M with (M @ v)[i] = sum_a taps[a] * v[reflect(i + a - p)]."""
    K = taps.shape[0]
    m = jnp.zeros((n, n), jnp.float32)
    rows = np.arange(n)
    for a in range(K):
        src = np.array([_reflect_index(i + a - p, n) for i in range(n)], dtype=np.int32)
        m = m.at[rows, src].add(taps[a])
    return m


def _round_up(x, m):
    return ((x + m - 1) // m) * m


def _vmem_budget():
    """(vmem_limit_bytes, block_budget_bytes) — generation aware."""
    try:
        cap = int(pltpu.get_tpu_info().vmem_capacity_bytes)
    except Exception:
        cap = 64 * 1024 * 1024          # conservative fallback: v7x per-core VMEM
    limit = (3 * cap) // 4              # scoped VMEM limit requested from Mosaic
    budget = limit // 2                 # what blocks are sized against (headroom
                                        # for compiler-internal scratch)
    return limit, budget


_MIN_PIPELINE_STEPS = 4                 # >= 2 steps per TensorCore on v7x megacore


# ----------------------------------------------------------------------------
# Kernels
# ----------------------------------------------------------------------------
def _flat_kernel(mt_ref, x_ref, o_ref):
    # Small-plane path: one lane-dense MXU matmul per block.
    # x_ref: (TB, H*W); mt_ref: (H*W, H*W) resident constant operator.
    y = jnp.dot(x_ref[...], mt_ref[...],
                preferred_element_type=jnp.float32,
                precision=jax.lax.Precision.HIGHEST)
    o_ref[...] = y.astype(o_ref.dtype)


def _band_kernel(bv_ref, bh_ref, x_ref, o_ref):
    # Large-plane path: per plane, out = Bv @ x @ BhR (two MXU matmuls).
    # bv_ref: (H, H), bh_ref: (W, W) — resident; x_ref/o_ref: (TB, H, W).
    bv = bv_ref[...]
    bh = bh_ref[...]

    def body(i, carry):
        xi = x_ref[i]                                             # (H, W)
        t = jnp.dot(bv, xi, preferred_element_type=jnp.float32,
                    precision=jax.lax.Precision.HIGHEST)
        y = jnp.dot(t, bh, preferred_element_type=jnp.float32,
                    precision=jax.lax.Precision.HIGHEST)
        o_ref[i] = y.astype(o_ref.dtype)
        return carry

    jax.lax.fori_loop(0, x_ref.shape[0], body, 0)


# ----------------------------------------------------------------------------
# Wrapper
# ----------------------------------------------------------------------------
def gaussian_smoothing(x, weight, kernel_size, *, flat_limit_bytes=4 * 1024 * 1024):
    """x: (N, C, H, W); weight: (C, K, K) Gaussian buffer. Returns (N, C, H, W)."""
    N, C, H, W = x.shape
    K = int(kernel_size)
    if K % 2 != 1:
        # F.conv2d with even K over reflect-padded input changes spatial size;
        # only the odd-K ("same" size) case is supported here.
        raise NotImplementedError("gaussian_smoothing: only odd kernel_size is supported")
    p = K // 2
    assert p < H and p < W, "reflect padding requires kernel_size//2 < spatial dims"

    B = N * C
    HW = H * W
    in_it = jnp.dtype(x.dtype).itemsize

    # Exact separable factorization of the module's rank-1 kernel (see contract).
    w2d = weight[0].astype(jnp.float32)              # (K, K)
    wrow = jnp.sum(w2d, axis=1)                      # (K,) vertical taps
    wcol = jnp.sum(w2d, axis=0)                      # (K,) horizontal taps

    bv32 = _band_matrix(H, wrow, p)                  # (H, H): out = Bv @ x
    bhr32 = _band_matrix(W, wcol, p).T               # (W, W): out = x @ BhR

    # bf16 inputs stay bf16 into the MXU (native on v6e/v7x); f32 stays f32.
    mat_dtype = x.dtype if x.dtype == jnp.bfloat16 else jnp.float32
    mat_it = jnp.dtype(mat_dtype).itemsize

    vmem_limit, budget = _vmem_budget()

    use_flat = (HW * HW * 4) <= flat_limit_bytes     # kron operator fits comfortably

    if use_flat:
        # ---- lane-dense flat path: out_flat = x_flat @ kron(Bv.T, BhR) ----
        mt = jnp.kron(bv32.T, bhr32).astype(mat_dtype)       # (HW, HW)
        xf = x.reshape(B, HW)                                # metadata-only reshape

        lane = _round_up(HW, 128)
        per_plane = lane * (2 * in_it + 2 * in_it + 2 * 4)   # in/out double-buffered + f32 temps
        fixed = 2 * _round_up(HW, 8) * lane * mat_it         # resident MT (double-buffered)
        tb = max(1, (budget - fixed) // per_plane)
        tb = min(tb, max(1, pl.cdiv(B, _MIN_PIPELINE_STEPS)))
        if B >= 8:
            tb = min(B, max(8, (tb // 8) * 8))               # sublane (8) block tiling
        else:
            tb = B
        grid = (pl.cdiv(B, tb),)

        cost = pl.CostEstimate(
            flops=2 * B * HW * HW,
            transcendentals=0,
            bytes_accessed=2 * B * HW * in_it + HW * HW * mat_it,
        )

        out = pl.pallas_call(
            _flat_kernel,
            out_shape=jax.ShapeDtypeStruct((B, HW), x.dtype),
            grid=grid,
            in_specs=[
                pl.BlockSpec((HW, HW), lambda b: (0, 0)),    # operator, fetched once
                pl.BlockSpec((tb, HW), lambda b: (b, 0)),
            ],
            out_specs=pl.BlockSpec((tb, HW), lambda b: (b, 0)),
            compiler_params=pltpu.CompilerParams(
                dimension_semantics=("parallel",),
                vmem_limit_bytes=vmem_limit,
            ),
            cost_estimate=cost,
        )(mt, xf)
        return out.reshape(N, C, H, W)

    # ---- large-plane path: per-plane Bv @ x @ BhR ----
    bv = bv32.astype(mat_dtype)
    bhr = bhr32.astype(mat_dtype)
    xb = x.reshape(B, H, W)                                  # metadata-only reshape

    plane = _round_up(H, 8) * _round_up(W, 128)              # tiling-rounded plane footprint
    per_plane = plane * (2 * in_it + 2 * in_it)              # in/out double-buffered
    fixed = (2 * _round_up(H, 8) * _round_up(H, 128) * mat_it
             + 2 * _round_up(W, 8) * _round_up(W, 128) * mat_it
             + 3 * plane * 4)                                # per-iteration f32 temps
    tb = max(1, (budget - fixed) // per_plane)
    tb = min(tb, max(1, pl.cdiv(B, _MIN_PIPELINE_STEPS)))
    tb = min(tb, B)
    grid = (pl.cdiv(B, tb),)

    cost = pl.CostEstimate(
        flops=2 * B * (H * H * W + H * W * W),
        transcendentals=0,
        bytes_accessed=2 * B * HW * in_it + (H * H + W * W) * mat_it,
    )

    out = pl.pallas_call(
        _band_kernel,
        out_shape=jax.ShapeDtypeStruct((B, H, W), x.dtype),
        grid=grid,
        in_specs=[
            pl.BlockSpec((H, H), lambda b: (0, 0)),          # Bv, fetched once
            pl.BlockSpec((W, W), lambda b: (0, 0)),          # BhR, fetched once
            pl.BlockSpec((tb, H, W), lambda b: (b, 0, 0)),
        ],
        out_specs=pl.BlockSpec((tb, H, W), lambda b: (b, 0, 0)),
        compiler_params=pltpu.CompilerParams(
            dimension_semantics=("parallel",),
            vmem_limit_bytes=vmem_limit,
        ),
        cost_estimate=cost,
    )(bv, bhr, xb)
    return out.reshape(N, C, H, W)


# ----------------------------------------------------------------------------
# Pure-JAX reference: reflect pad + depthwise conv (groups=C), NCHW/OIHW
# ----------------------------------------------------------------------------
def _reference(x, weight, kernel_size):
    C = x.shape[1]
    p = kernel_size // 2
    xp = jnp.pad(x, ((0, 0), (0, 0), (p, p), (p, p)), mode="reflect")
    w = weight[:, None, :, :]  # (C, 1, K, K)
    return jax.lax.conv_general_dilated(
        xp, w, window_strides=(1, 1), padding="VALID",
        dimension_numbers=("NCHW", "OIHW", "NCHW"),
        feature_group_count=C,
        precision=jax.lax.Precision.HIGHEST,
    )


if __name__ == "__main__":
    N, C, H, W = 2, 4, 16, 16
    kernel_size = 3
    sigma = 1.0

    key = jax.random.PRNGKey(0)
    x = jax.random.normal(key, (N, C, H, W), dtype=jnp.float32)
    weight = gaussian_weights(C, kernel_size, sigma, dim=2)

    out = jax.block_until_ready(gaussian_smoothing(x, weight, kernel_size))
    ref = jax.block_until_ready(_reference(x, weight, kernel_size))

    assert out.shape == (N, C, H, W)
    assert jnp.allclose(out, ref, rtol=1e-5, atol=1e-5), float(jnp.max(jnp.abs(out - ref)))

    print("KERNEL_OK")
</pallas_src>

<mosaic_0001>
module attributes {stable_mosaic.version = 11 : i64} {
  func.func @_flat_kernel(%arg0: i32, %arg1: memref<256x256xf32, #tpu.memory_space<vmem>>, %arg2: memref<8x256xf32, #tpu.memory_space<vmem>>, %arg3: memref<8x256xf32, #tpu.memory_space<vmem>>) attributes {dimension_semantics = [#tpu.dimension_semantics<parallel>], iteration_bounds = array<i64: 1>, scalar_prefetch = 0 : i64, scratch_operands = 0 : i64, tpu.core_type = #tpu.core_type<tc>, window_params = [{pipeline_mode = #tpu.pipeline_mode<synchronous>, transform_indices = @transform_0, window_bounds = array<i64: 256, 256>}, {transform_indices = @transform_1, window_bounds = array<i64: 8, 256>}, {transform_indices = @transform_2, window_bounds = array<i64: 8, 256>}]} {
    %c0 = arith.constant 0 : index
    %c0_0 = arith.constant 0 : index
    %0 = vector.load %arg2[%c0, %c0_0] : memref<8x256xf32, #tpu.memory_space<vmem>>, vector<8x256xf32>
    %c0_1 = arith.constant 0 : index
    %c0_2 = arith.constant 0 : index
    %1 = vector.load %arg1[%c0_1, %c0_2] : memref<256x256xf32, #tpu.memory_space<vmem>>, vector<256x256xf32>
    %cst = arith.constant dense<0.000000e+00> : vector<8x256xf32>
    %2 = tpu.matmul %0, %1, %cst {dimension_numbers = #tpu.dot_dimension_numbers<[1], [0], [0], [1], [0, 0, 1, 1], [], []>, precision = #tpu.contract_precision<fp32>} : vector<8x256xf32>, vector<256x256xf32>, vector<8x256xf32> -> vector<8x256xf32>
    %c0_3 = arith.constant 0 : index
    %c0_4 = arith.constant 0 : index
    %3 = vector.load %arg3[%c0_3, %c0_4] : memref<8x256xf32, #tpu.memory_space<vmem>>, vector<8x256xf32>
    tpu.vector_store %arg3[%c0_3, %c0_4], %2 {strides = array<i32>} : memref<8x256xf32, #tpu.memory_space<vmem>>, vector<8x256xf32>,
    return
  }
  func.func @transform_0(%arg0: i32) -> (i32, i32) {
    %c0_i32 = arith.constant 0 : i32
    %c0_i32_0 = arith.constant 0 : i32
    %c0_i32_1 = arith.constant 0 : i32
    return %c0_i32, %c0_i32_0 : i32, i32
  }
  func.func @transform_1(%arg0: i32) -> (i32, i32) {
    %c0_i32 = arith.constant 0 : i32
    %c0_i32_0 = arith.constant 0 : i32
    return %arg0, %c0_i32 : i32, i32
  }
  func.func @transform_2(%arg0: i32) -> (i32, i32) {
    %c0_i32 = arith.constant 0 : i32
    %c0_i32_0 = arith.constant 0 : i32
    return %arg0, %c0_i32 : i32, i32
  }
}

</mosaic_0001>

<llo_original>
// kernel: tpu_custom_call.1
$region0: #{tpu_custom_call.1}
  #allocation0 [shape = 'u32[]', space=smem, size = 0x4, offset = 0x4, fixed_abs, tag = 'smem constant byte address 0x4 - core index']
  #allocation1 [shape = 'u32[144,128]{1,0:T(1,128)}', space=vmem, size = 0x12000, scoped, tag = 'internal scratch']
  %s0 = inlined_call_operand.hbm [shape: f32[256,256], index: 0, kind: input, shape index: {}]
  %s1 = inlined_call_operand.hbm [shape: f32[8,256], index: 1, kind: input, shape index: {}]
  %s2 = inlined_call_operand.hbm [shape: f32[8,256], index: 2, kind: output, shape index: {}]
  %s3 = sld [smem:[#allocation0]]
  $region26: #{tpu_custom_call.1} parent=0
    _
  %s5 = ssub.s32 1, %s3
  %s6 = scalar_select 0, %s5, %s3
  $region1: #{tpu_custom_call.1} parent=0
    #allocation2 [shape = 'u8[262144]{0}', space=vmem, size = 0x40000, scoped, tag = 'input window, operand 0, single buffered']
    #allocation3 [shape = 's32[1]{0}', space=sflag, size = 0x4, scoped, tag = 'scoped memory for tpu_custom_call.1']
    #allocation4 [shape = 's32[1]{0}', space=sflag, size = 0x4, scoped, tag = 'scoped memory for tpu_custom_call.1']
    #allocation5 [shape = 'u8[8192]{0}', space=vmem, size = 0x2000, scoped, tag = 'input window, operand 1, single buffered']
    #allocation6 [shape = 's32[1]{0}', space=sflag, size = 0x4, scoped, tag = 'scoped memory for tpu_custom_call.1']
    #allocation7 [shape = 'u8[8192]{0}', space=vmem, size = 0x2000, scoped, tag = 'output window, operand 0, single buffered']
    %7 = vsyncpa [#allocation3], 0
    %8 = vsyncpa [#allocation6], 0
    %9 = vsyncpa [#allocation4], 0
    // Predicated region
    $region2: #{tpu_custom_call.1} parent=1 // pred_check
      _
    $region3: #{tpu_custom_call.1} parent=1 // pred_check_branch
      %11 = sbr.rel (0) target = $region5
    $region4: #{tpu_custom_call.1} parent=1 // pred_region
      %s13 = ssub.s32 8192, 8192
      %14 = vsyncadd [#allocation3], %s13
      %s15 = sshll.u32 [#allocation2], 4
      %s16 = int_to_ptr.vmem [resolvable:$true] %s15
      %21 = dma.hbm_to_vmem [thread:$0]  %s0, 8192, %s16, [#allocation3], 256, 256, 16
    $region5: #{tpu_custom_call.1} parent=1 // pred_fallthru
      _
    // Predicated region
    $region6: #{tpu_custom_call.1} parent=1 // pred_check
      _
    $region7: #{tpu_custom_call.1} parent=1 // pred_check_branch
      %23 = sbr.rel (0) target = $region9
    $region8: #{tpu_custom_call.1} parent=1 // pred_region
      %s25 = ssub.s32 256, 256
      %26 = vsyncadd [#allocation6], %s25
      %s28 = sshll.u32 [#allocation5], 4
      %s29 = int_to_ptr.vmem [resolvable:$true] %s28
      %31 = dma.hbm_to_vmem [thread:$0]  %s1, 256, %s29, [#allocation6]
    $region9: #{tpu_custom_call.1} parent=1 // pred_fallthru
      _
    // Predicated region
    $region10: #{tpu_custom_call.1} parent=1 // pred_check
      _
    $region11: #{tpu_custom_call.1} parent=1 // pred_check_branch
      %33 = sbr.rel (0) target = $region13
    $region12: #{tpu_custom_call.1} parent=1 // pred_region
      %34 = dma.done [#allocation3], 8192
    $region13: #{tpu_custom_call.1} parent=1 // pred_fallthru
      _
    // Predicated region
    $region14: #{tpu_custom_call.1} parent=1 // pred_check
      _
    $region15: #{tpu_custom_call.1} parent=1 // pred_check_branch
      %36 = sbr.rel (0) target = $region17
    $region16: #{tpu_custom_call.1} parent=1 // pred_region
      %37 = dma.done [#allocation6], 256
    $region17: #{tpu_custom_call.1} parent=1 // pred_fallthru
      _
    %v38 = vld [vmem:[#allocation5] sm:$0xff]
    %v39 = vld [vmem:[#allocation5 + $0x8] sm:$0xff]
    %v40 = vld [vmem:[#allocation2] sm:$0xff]
    %v41 = vld [vmem:[#allocation2 + $0x8] sm:$0xff]
    %v42 = vld [vmem:[#allocation2 + $0x10] sm:$0xff]
    %v43 = vld [vmem:[#allocation2 + $0x18] sm:$0xff]
    %v44 = vld [vmem:[#allocation2 + $0x20] sm:$0xff]
    %v45 = vld [vmem:[#allocation2 + $0x28] sm:$0xff]
    %v46 = vld [vmem:[#allocation2 + $0x30] sm:$0xff]
    %v47 = vld [vmem:[#allocation2 + $0x38] sm:$0xff]
    %v48 = vld [vmem:[#allocation2 + $0x40] sm:$0xff]
    %v49 = vld [vmem:[#allocation2 + $0x48] sm:$0xff]
    %v50 = vld [vmem:[#allocation2 + $0x50] sm:$0xff]
    %v51 = vld [vmem:[#allocation2 + $0x58] sm:$0xff]
    %v52 = vld [vmem:[#allocation2 + $0x60] sm:$0xff]
    %v53 = vld [vmem:[#allocation2 + $0x68] sm:$0xff]
    %v54 = vld [vmem:[#allocation2 + $0x70] sm:$0xff]
    %v55 = vld [vmem:[#allocation2 + $0x78] sm:$0xff]
    %v56 = vld [vmem:[#allocation2 + $0x80] sm:$0xff]
    %v57 = vld [vmem:[#allocation2 + $0x88] sm:$0xff]
    %v58 = vld [vmem:[#allocation2 + $0x90] sm:$0xff]
    %v59 = vld [vmem:[#allocation2 + $0x98] sm:$0xff]
    %v60 = vld [vmem:[#allocation2 + $0xa0] sm:$0xff]
    %v61 = vld [vmem:[#allocation2 + $0xa8] sm:$0xff]
    %v62 = vld [vmem:[#allocation2 + $0xb0] sm:$0xff]
    %v63 = vld [vmem:[#allocation2 + $0xb8] sm:$0xff]
    %v64 = vld [vmem:[#allocation2 + $0xc0] sm:$0xff]
    %v65 = vld [vmem:[#allocation2 + $0xc8] sm:$0xff]
    %v66 = vld [vmem:[#allocation2 + $0xd0] sm:$0xff]
    %v67 = vld [vmem:[#allocation2 + $0xd8] sm:$0xff]
    %v68 = vld [vmem:[#allocation2 + $0xe0] sm:$0xff]
    %v69 = vld [vmem:[#allocation2 + $0xe8] sm:$0xff]
    %v70 = vld [vmem:[#allocation2 + $0xf0] sm:$0xff]
    %v71 = vld [vmem:[#allocation2 + $0xf8] sm:$0xff]
    %v72 = vld [vmem:[#allocation2 + $0x100] sm:$0xff]
    %v73 = vld [vmem:[#allocation2 + $0x108] sm:$0xff]
    %v74 = vld [vmem:[#allocation2 + $0x110] sm:$0xff]
    %v75 = vld [vmem:[#allocation2 + $0x118] sm:$0xff]
    %v76 = vld [vmem:[#allocation2 + $0x120] sm:$0xff]
    %v77 = vld [vmem:[#allocation2 + $0x128] sm:$0xff]
    %v78 = vld [vmem:[#allocation2 + $0x130] sm:$0xff]
    %v79 = vld [vmem:[#allocation2 + $0x138] sm:$0xff]
    %v80 = vld [vmem:[#allocation2 + $0x140] sm:$0xff]
    %v81 = vld [vmem:[#allocation2 + $0x148] sm:$0xff]
    %v82 = vld [vmem:[#allocation2 + $0x150] sm:$0xff]
    %v83 = vld [vmem:[#allocation2 + $0x158] sm:$0xff]
    %v84 = vld [vmem:[#allocation2 + $0x160] sm:$0xff]
    %v85 = vld [vmem:[#allocation2 + $0x168] sm:$0xff]
    %v86 = vld [vmem:[#allocation2 + $0x170] sm:$0xff]
    %v87 = vld [vmem:[#allocation2 + $0x178] sm:$0xff]
    %v88 = vld [vmem:[#allocation2 + $0x180] sm:$0xff]
    %v89 = vld [vmem:[#allocation2 + $0x188] sm:$0xff]
    %v90 = vld [vmem:[#allocation2 + $0x190] sm:$0xff]
    %v91 = vld [vmem:[#allocation2 + $0x198] sm:$0xff]
    %v92 = vld [vmem:[#allocation2 + $0x1a0] sm:$0xff]
    %v93 = vld [vmem:[#allocation2 + $0x1a8] sm:$0xff]
    %v94 = vld [vmem:[#allocation2 + $0x1b0] sm:$0xff]
    %v95 = vld [vmem:[#allocation2 + $0x1b8] sm:$0xff]
    %v96 = vld [vmem:[#allocation2 + $0x1c0] sm:$0xff]
    %v97 = vld [vmem:[#allocation2 + $0x1c8] sm:$0xff]
    %v98 = vld [vmem:[#allocation2 + $0x1d0] sm:$0xff]
    %v99 = vld [vmem:[#allocation2 + $0x1d8] sm:$0xff]
    %v100 = vld [vmem:[#allocation2 + $0x1e0] sm:$0xff]
    %v101 = vld [vmem:[#allocation2 + $0x1e8] sm:$0xff]
    %v102 = vld [vmem:[#allocation2 + $0x1f0] sm:$0xff]
    %v103 = vld [vmem:[#allocation2 + $0x1f8] sm:$0xff]
    %v104 = vand.u32 %v71, 4294901760
    %105 = vmatprep.subr.mxu0 %v104
    %v106 = vand.u32 %v70, 4294901760
    %107 = vmatpush1.msra.mxu0 %v106
    %v108 = vand.u32 %v69, 4294901760
    %109 = vmatprep.subr.mxu0 %v108
    %v110 = vand.u32 %v68, 4294901760
    %111 = vmatpush1.msra.mxu0 %v110
    %v112 = vand.u32 %v67, 4294901760
    %113 = vmatprep.subr.mxu0 %v112
    %v114 = vand.u32 %v66, 4294901760
    %115 = vmatpush1.msra.mxu0 %v114
    %v116 = vand.u32 %v65, 4294901760
    %117 = vmatprep.subr.mxu0 %v116
    %v118 = vand.u32 %v64, 4294901760
    %119 = vmatpush1.msra.mxu0 %v118
    %v120 = vand.u32 %v63, 4294901760
    %121 = vmatprep.subr.mxu0 %v120
    %v122 = vand.u32 %v62, 4294901760
    %123 = vmatpush1.msra.mxu0 %v122
    %v124 = vand.u32 %v61, 4294901760
    %125 = vmatprep.subr.mxu0 %v124
    %v126 = vand.u32 %v60, 4294901760
    %127 = vmatpush1.msra.mxu0 %v126
    %v128 = vand.u32 %v59, 4294901760
    %129 = vmatprep.subr.mxu0 %v128
    %v130 = vand.u32 %v58, 4294901760
    %131 = vmatpush1.msra.mxu0 %v130
    %v132 = vand.u32 %v57, 4294901760
    %133 = vmatprep.subr.mxu0 %v132
    %v134 = vand.u32 %v56, 4294901760
    %135 = vmatpush1.msra.mxu0 %v134
    %v136 = vand.u32 %v55, 4294901760
    %137 = vmatprep.subr.mxu0 %v136
    %v138 = vand.u32 %v54, 4294901760
    %139 = vmatpush1.msra.mxu0 %v138
    %v140 = vand.u32 %v53, 4294901760
    %141 = vmatprep.subr.mxu0 %v140
    %v142 = vand.u32 %v52, 4294901760
    %143 = vmatpush1.msra.mxu0 %v142
    %v144 = vand.u32 %v51, 4294901760
    %145 = vmatprep.subr.mxu0 %v144
    %v146 = vand.u32 %v50, 4294901760
    %147 = vmatpush1.msra.mxu0 %v146
    %v148 = vand.u32 %v49, 4294901760
    %149 = vmatprep.subr.mxu0 %v148
    %v150 = vand.u32 %v48, 4294901760
    %151 = vmatpush1.msra.mxu0 %v150
    %v152 = vand.u32 %v47, 4294901760
    %153 = vmatprep.subr.mxu0 %v152
    %v154 = vand.u32 %v46, 4294901760
    %155 = vmatpush1.msra.mxu0 %v154
    %v156 = vand.u32 %v45, 4294901760
    %157 = vmatprep.subr.mxu0 %v156
    %v158 = vand.u32 %v44, 4294901760
    %159 = vmatpush1.msra.mxu0 %v158
    %v160 = vand.u32 %v43, 4294901760
    %161 = vmatprep.subr.mxu0 %v160
    %v162 = vand.u32 %v42, 4294901760
    %163 = vmatpush1.msra.mxu0 %v162
    %v164 = vand.u32 %v41, 4294901760
    %165 = vmatprep.subr.mxu0 %v164
    %v166 = vand.u32 %v40, 4294901760
    %167 = vmatpush1.msra.mxu0 %v166
    %v168 = vand.u32 %v103, 4294901760
    %169 = vmatprep.subr.mxu0 %v168
    %v170 = vand.u32 %v102, 4294901760
    %171 = vmatpush2.msra.mxu0 %v170
    %v172 = vand.u32 %v101, 4294901760
    %173 = vmatprep.subr.mxu0 %v172
    %v174 = vand.u32 %v100, 4294901760
    %175 = vmatpush2.msra.mxu0 %v174
    %v176 = vand.u32 %v99, 4294901760
    %177 = vmatprep.subr.mxu0 %v176
    %v178 = vand.u32 %v98, 4294901760
    %179 = vmatpush2.msra.mxu0 %v178
    %v180 = vand.u32 %v97, 4294901760
    %181 = vmatprep.subr.mxu0 %v180
    %v182 = vand.u32 %v96, 4294901760
    %183 = vmatpush2.msra.mxu0 %v182
    %v184 = vand.u32 %v95, 4294901760
    %185 = vmatprep.subr.mxu0 %v184
    %v186 = vand.u32 %v94, 4294901760
    %187 = vmatpush2.msra.mxu0 %v186
    %v188 = vand.u32 %v93, 4294901760
    %189 = vmatprep.subr.mxu0 %v188
    %v190 = vand.u32 %v92, 4294901760
    %191 = vmatpush2.msra.mxu0 %v190
    %v192 = vand.u32 %v91, 4294901760
    %193 = vmatprep.subr.mxu0 %v192
    %v194 = vand.u32 %v90, 4294901760
    %195 = vmatpush2.msra.mxu0 %v194
    %v196 = vand.u32 %v89, 4294901760
    %197 = vmatprep.subr.mxu0 %v196
    %v198 = vand.u32 %v88, 4294901760
    %199 = vmatpush2.msra.mxu0 %v198
    %v200 = vand.u32 %v87, 4294901760
    %201 = vmatprep.subr.mxu0 %v200
    %v202 = vand.u32 %v86, 4294901760
    %203 = vmatpush2.msra.mxu0 %v202
    %v204 = vand.u32 %v85, 4294901760
    %205 = vmatprep.subr.mxu0 %v204
    %v206 = vand.u32 %v84, 4294901760
    %207 = vmatpush2.msra.mxu0 %v206
    %v208 = vand.u32 %v83, 4294901760
    %209 = vmatprep.subr.mxu0 %v208
    %v210 = vand.u32 %v82, 4294901760
    %211 = vmatpush2.msra.mxu0 %v210
    %v212 = vand.u32 %v81, 4294901760
    %213 = vmatprep.subr.mxu0 %v212
    %v214 = vand.u32 %v80, 4294901760
    %215 = vmatpush2.msra.mxu0 %v214
    %v216 = vand.u32 %v79, 4294901760
    %217 = vmatprep.subr.mxu0 %v216
    %v218 = vand.u32 %v78, 4294901760
    %219 = vmatpush2.msra.mxu0 %v218
    %v220 = vand.u32 %v77, 4294901760
    %221 = vmatprep.subr.mxu0 %v220
    %v222 = vand.u32 %v76, 4294901760
    %223 = vmatpush2.msra.mxu0 %v222
    %v224 = vand.u32 %v75, 4294901760
    %225 = vmatprep.subr.mxu0 %v224
    %v226 = vand.u32 %v74, 4294901760
    %227 = vmatpush2.msra.mxu0 %v226
    %v228 = vand.u32 %v73, 4294901760
    %229 = vmatprep.subr.mxu0 %v228
    %v230 = vand.u32 %v72, 4294901760
    %231 = vmatpush2.msra.mxu0 %v230
    %v232 = vand.u32 %v39, 4294901760
    %v233 = vsub.f32 %v39, %v232
    %v234 = vand.u32 %v233, 4294901760
    %v235 = vsub.f32 %v233, %v234
    %v236 = vand.u32 %v235, 4294901760
    %237 = vmatprep.mubr.f32.mxu0 %v236
    %v238 = vand.u32 %v38, 4294901760
    %v239 = vsub.f32 %v38, %v238
    %v240 = vand.u32 %v239, 4294901760
    %v241 = vsub.f32 %v239, %v240
    %v242 = vand.u32 %v241, 4294901760
    %243 = vmatmul.mubr.f32.gmra.mxu0 %v242
    %v244 = vpop.f32.mrf.mxu0
    %v245 = vadd.f32 0.0, %v244
    %v246 = vpop.f32.mrf.mxu0
    %v247 = vadd.f32 0.0, %v246
    %248 = vdwg.mxu0
    %v249 = vand.u32 %v71, 4294901760
    %v250 = vsub.f32 %v71, %v249
    %v251 = vand.u32 %v250, 4294901760
    %v252 = vsub.f32 %v250, %v251
    %v253 = vand.u32 %v252, 4294901760
    %254 = vmatprep.subr.mxu0 %v253
    %v255 = vand.u32 %v70, 4294901760
    %v256 = vsub.f32 %v70, %v255
    %v257 = vand.u32 %v256, 4294901760
    %v258 = vsub.f32 %v256, %v257
    %v259 = vand.u32 %v258, 4294901760
    %260 = vmatpush1.msra.mxu0 %v259
    %v261 = vand.u32 %v69, 4294901760
    %v262 = vsub.f32 %v69, %v261
    %v263 = vand.u32 %v262, 4294901760
    %v264 = vsub.f32 %v262, %v263
    %v265 = vand.u32 %v264, 4294901760
    %266 = vmatprep.subr.mxu0 %v265
    %v267 = vand.u32 %v68, 4294901760
    %v268 = vsub.f32 %v68, %v267
    %v269 = vand.u32 %v268, 4294901760
    %v270 = vsub.f32 %v268, %v269
    %v271 = vand.u32 %v270, 4294901760
    %272 = vmatpush1.msra.mxu0 %v271
    %v273 = vand.u32 %v67, 4294901760
    %v274 = vsub.f32 %v67, %v273
    %v275 = vand.u32 %v274, 4294901760
    %v276 = vsub.f32 %v274, %v275
    %v277 = vand.u32 %v276, 4294901760
    %278 = vmatprep.subr.mxu0 %v277
    %v279 = vand.u32 %v66, 4294901760
    %v280 = vsub.f32 %v66, %v279
    %v281 = vand.u32 %v280, 4294901760
    %v282 = vsub.f32 %v280, %v281
    %v283 = vand.u32 %v282, 4294901760
    %284 = vmatpush1.msra.mxu0 %v283
    %v285 = vand.u32 %v65, 4294901760
    %v286 = vsub.f32 %v65, %v285
    %v287 = vand.u32 %v286, 4294901760
    %v288 = vsub.f32 %v286, %v287
    %v289 = vand.u32 %v288, 4294901760
    %290 = vmatprep.subr.mxu0 %v289
    %v291 = vand.u32 %v64, 4294901760
    %v292 = vsub.f32 %v64, %v291
    %v293 = vand.u32 %v292, 4294901760
    %v294 = vsub.f32 %v292, %v293
    %v295 = vand.u32 %v294, 4294901760
    %296 = vmatpush1.msra.mxu0 %v295
    %v297 = vand.u32 %v63, 4294901760
    %v298 = vsub.f32 %v63, %v297
    %v299 = vand.u32 %v298, 4294901760
    %v300 = vsub.f32 %v298, %v299
    %v301 = vand.u32 %v300, 4294901760
    %302 = vmatprep.subr.mxu0 %v301
    %v303 = vand.u32 %v62, 4294901760
    %v304 = vsub.f32 %v62, %v303
    %v305 = vand.u32 %v304, 4294901760
    %v306 = vsub.f32 %v304, %v305
    %v307 = vand.u32 %v306, 4294901760
    %308 = vmatpush1.msra.mxu0 %v307
    %v309 = vand.u32 %v61, 4294901760
    %v310 = vsub.f32 %v61, %v309
    %v311 = vand.u32 %v310, 4294901760
    %v312 = vsub.f32 %v310, %v311
    %v313 = vand.u32 %v312, 4294901760
    %314 = vmatprep.subr.mxu0 %v313
    %v315 = vand.u32 %v60, 4294901760
    %v316 = vsub.f32 %v60, %v315
    %v317 = vand.u32 %v316, 4294901760
    %v318 = vsub.f32 %v316, %v317
    %v319 = vand.u32 %v318, 4294901760
    %320 = vmatpush1.msra.mxu0 %v319
    %v321 = vand.u32 %v59, 4294901760
    %v322 = vsub.f32 %v59, %v321
    %v323 = vand.u32 %v322, 4294901760
    %v324 = vsub.f32 %v322, %v323
    %v325 = vand.u32 %v324, 4294901760
    %326 = vmatprep.subr.mxu0 %v325
    %v327 = vand.u32 %v58, 4294901760
    %v328 = vsub.f32 %v58, %v327
    %v329 = vand.u32 %v328, 4294901760
    %v330 = vsub.f32 %v328, %v329
    %v331 = vand.u32 %v330, 4294901760
    %332 = vmatpush1.msra.mxu0 %v331
    %v333 = vand.u32 %v57, 4294901760
    %v334 = vsub.f32 %v57, %v333
    %v335 = vand.u32 %v334, 4294901760
    %v336 = vsub.f32 %v334, %v335
    %v337 = vand.u32 %v336, 4294901760
    %338 = vmatprep.subr.mxu0 %v337
    %v339 = vand.u32 %v56, 4294901760
    %v340 = vsub.f32 %v56, %v339
    %v341 = vand.u32 %v340, 4294901760
    %v342 = vsub.f32 %v340, %v341
    %v343 = vand.u32 %v342, 4294901760
    %344 = vmatpush1.msra.mxu0 %v343
    %v345 = vand.u32 %v55, 4294901760
    %v346 = vsub.f32 %v55, %v345
    %v347 = vand.u32 %v346, 4294901760
    %v348 = vsub.f32 %v346, %v347
    %v349 = vand.u32 %v348, 4294901760
    %350 = vmatprep.subr.mxu0 %v349
    %v351 = vand.u32 %v54, 4294901760
    %v352 = vsub.f32 %v54, %v351
    %v353 = vand.u32 %v352, 4294901760
    %v354 = vsub.f32 %v352, %v353
    %v355 = vand.u32 %v354, 4294901760
    %356 = vmatpush1.msra.mxu0 %v355
    %v357 = vand.u32 %v53, 4294901760
    %v358 = vsub.f32 %v53, %v357
    %v359 = vand.u32 %v358, 4294901760
    %v360 = vsub.f32 %v358, %v359
    %v361 = vand.u32 %v360, 4294901760
    %362 = vmatprep.subr.mxu0 %v361
    %v363 = vand.u32 %v52, 4294901760
    %v364 = vsub.f32 %v52, %v363
    %v365 = vand.u32 %v364, 4294901760
    %v366 = vsub.f32 %v364, %v365
    %v367 = vand.u32 %v366, 4294901760
    %368 = vmatpush1.msra.mxu0 %v367
    %v369 = vand.u32 %v51, 4294901760
    %v370 = vsub.f32 %v51, %v369
    %v371 = vand.u32 %v370, 4294901760
    %v372 = vsub.f32 %v370, %v371
    %v373 = vand.u32 %v372, 4294901760
    %374 = vmatprep.subr.mxu0 %v373
    %v375 = vand.u32 %v50, 4294901760
    %v376 = vsub.f32 %v50, %v375
    %v377 = vand.u32 %v376, 4294901760
    %v378 = vsub.f32 %v376, %v377
    %v379 = vand.u32 %v378, 4294901760
    %380 = vmatpush1.msra.mxu0 %v379
    %v381 = vand.u32 %v49, 4294901760
    %v382 = vsub.f32 %v49, %v381
    %v383 = vand.u32 %v382, 4294901760
    %v384 = vsub.f32 %v382, %v383
    %v385 = vand.u32 %v384, 4294901760
    %386 = vmatprep.subr.mxu0 %v385
    %v387 = vand.u32 %v48, 4294901760
    %v388 = vsub.f32 %v48, %v387
    %v389 = vand.u32 %v388, 4294901760
    %v390 = vsub.f32 %v388, %v389
    %v391 = vand.u32 %v390, 4294901760
    %392 = vmatpush1.msra.mxu0 %v391
    %v393 = vand.u32 %v47, 4294901760
    %v394 = vsub.f32 %v47, %v393
    %v395 = vand.u32 %v394, 4294901760
    %v396 = vsub.f32 %v394, %v395
    %v397 = vand.u32 %v396, 4294901760
    %398 = vmatprep.subr.mxu0 %v397
    %v399 = vand.u32 %v46, 4294901760
    %v400 = vsub.f32 %v46, %v399
    %v401 = vand.u32 %v400, 4294901760
    %v402 = vsub.f32 %v400, %v401
    %v403 = vand.u32 %v402, 4294901760
    %404 = vmatpush1.msra.mxu0 %v403
    %v405 = vand.u32 %v45, 4294901760
    %v406 = vsub.f32 %v45, %v405
    %v407 = vand.u32 %v406, 4294901760
    %v408 = vsub.f32 %v406, %v407
    %v409 = vand.u32 %v408, 4294901760
    %410 = vmatprep.subr.mxu0 %v409
    %v411 = vand.u32 %v44, 4294901760
    %v412 = vsub.f32 %v44, %v411
    %v413 = vand.u32 %v412, 4294901760
    %v414 = vsub.f32 %v412, %v413
    %v415 = vand.u32 %v414, 4294901760
    %416 = vmatpush1.msra.mxu0 %v415
    %v417 = vand.u32 %v43, 4294901760
    %v418 = vsub.f32 %v43, %v417
    %v419 = vand.u32 %v418, 4294901760
    %v420 = vsub.f32 %v418, %v419
    %v421 = vand.u32 %v420, 4294901760
    %422 = vmatprep.subr.mxu0 %v421
    %v423 = vand.u32 %v42, 4294901760
    %v424 = vsub.f32 %v42, %v423
    %v425 = vand.u32 %v424, 4294901760
    %v426 = vsub.f32 %v424, %v425
    %v427 = vand.u32 %v426, 4294901760
    %428 = vmatpush1.msra.mxu0 %v427
    %v429 = vand.u32 %v41, 4294901760
    %v430 = vsub.f32 %v41, %v429
    %v431 = vand.u32 %v430, 4294901760
    %v432 = vsub.f32 %v430, %v431
    %v433 = vand.u32 %v432, 4294901760
    %434 = vmatprep.subr.mxu0 %v433
    %v435 = vand.u32 %v40, 4294901760
    %v436 = vsub.f32 %v40, %v435
    %v437 = vand.u32 %v436, 4294901760
    %v438 = vsub.f32 %v436, %v437
    %v439 = vand.u32 %v438, 4294901760
    %440 = vmatpush1.msra.mxu0 %v439
    %v441 = vand.u32 %v103, 4294901760
    %v442 = vsub.f32 %v103, %v441
    %v443 = vand.u32 %v442, 4294901760
    %v444 = vsub.f32 %v442, %v443
    %v445 = vand.u32 %v444, 4294901760
    %446 = vmatprep.subr.mxu0 %v445
    %v447 = vand.u32 %v102, 4294901760
    %v448 = vsub.f32 %v102, %v447
    %v449 = vand.u32 %v448, 4294901760
    %v450 = vsub.f32 %v448, %v449
    %v451 = vand.u32 %v450, 4294901760
    %452 = vmatpush2.msra.mxu0 %v451
    %v453 = vand.u32 %v101, 4294901760
    %v454 = vsub.f32 %v101, %v453
    %v455 = vand.u32 %v454, 4294901760
    %v456 = vsub.f32 %v454, %v455
    %v457 = vand.u32 %v456, 4294901760
    %458 = vmatprep.subr.mxu0 %v457
    %v459 = vand.u32 %v100, 4294901760
    %v460 = vsub.f32 %v100, %v459
    %v461 = vand.u32 %v460, 4294901760
    %v462 = vsub.f32 %v460, %v461
    %v463 = vand.u32 %v462, 4294901760
    %464 = vmatpush2.msra.mxu0 %v463
    %v465 = vand.u32 %v99, 4294901760
    %v466 = vsub.f32 %v99, %v465
    %v467 = vand.u32 %v466, 4294901760
    %v468 = vsub.f32 %v466, %v467
    %v469 = vand.u32 %v468, 4294901760
    %470 = vmatprep.subr.mxu0 %v469
    %v471 = vand.u32 %v98, 4294901760
    %v472 = vsub.f32 %v98, %v471
    %v473 = vand.u32 %v472, 4294901760
    %v474 = vsub.f32 %v472, %v473
    %v475 = vand.u32 %v474, 4294901760
    %476 = vmatpush2.msra.mxu0 %v475
    %v477 = vand.u32 %v97, 4294901760
    %v478 = vsub.f32 %v97, %v477
    %v479 = vand.u32 %v478, 4294901760
    %v480 = vsub.f32 %v478, %v479
    %v481 = vand.u32 %v480, 4294901760
    %482 = vmatprep.subr.mxu0 %v481
    %v483 = vand.u32 %v96, 4294901760
    %v484 = vsub.f32 %v96, %v483
    %v485 = vand.u32 %v484, 4294901760
    %v486 = vsub.f32 %v484, %v485
    %v487 = vand.u32 %v486, 4294901760
    %488 = vmatpush2.msra.mxu0 %v487
    %v489 = vand.u32 %v95, 4294901760
    %v490 = vsub.f32 %v95, %v489
    %v491 = vand.u32 %v490, 4294901760
    %v492 = vsub.f32 %v490, %v491
    %v493 = vand.u32 %v492, 4294901760
    %494 = vmatprep.subr.mxu0 %v493
    %v495 = vand.u32 %v94, 4294901760
    %v496 = vsub.f32 %v94, %v495
    %v497 = vand.u32 %v496, 4294901760
    %v498 = vsub.f32 %v496, %v497
    %v499 = vand.u32 %v498, 4294901760
    %500 = vmatpush2.msra.mxu0 %v499
    %v501 = vand.u32 %v93, 4294901760
    %v502 = vsub.f32 %v93, %v501
    %v503 = vand.u32 %v502, 4294901760
    %v504 = vsub.f32 %v502, %v503
    %v505 = vand.u32 %v504, 4294901760
    %506 = vmatprep.subr.mxu0 %v505
    %v507 = vand.u32 %v92, 4294901760
    %v508 = vsub.f32 %v92, %v507
    %v509 = vand.u32 %v508, 4294901760
    %v510 = vsub.f32 %v508, %v509
    %v511 = vand.u32 %v510, 4294901760
    %512 = vmatpush2.msra.mxu0 %v511
    %v513 = vand.u32 %v91, 4294901760
    %v514 = vsub.f32 %v91, %v513
    %v515 = vand.u32 %v514, 4294901760
    %v516 = vsub.f32 %v514, %v515
    %v517 = vand.u32 %v516, 4294901760
    %518 = vmatprep.subr.mxu0 %v517
    %v519 = vand.u32 %v90, 4294901760
    %v520 = vsub.f32 %v90, %v519
    %v521 = vand.u32 %v520, 4294901760
    %v522 = vsub.f32 %v520, %v521
    %v523 = vand.u32 %v522, 4294901760
    %524 = vmatpush2.msra.mxu0 %v523
    %v525 = vand.u32 %v89, 4294901760
    %v526 = vsub.f32 %v89, %v525
    %v527 = vand.u32 %v526, 4294901760
    %v528 = vsub.f32 %v526, %v527
    %v529 = vand.u32 %v528, 4294901760
    %530 = vmatprep.subr.mxu0 %v529
    %v531 = vand.u32 %v88, 4294901760
    %v532 = vsub.f32 %v88, %v531
    %v533 = vand.u32 %v532, 4294901760
    %v534 = vsub.f32 %v532, %v533
    %v535 = vand.u32 %v534, 4294901760
    %536 = vmatpush2.msra.mxu0 %v535
    %v537 = vand.u32 %v87, 4294901760
    %v538 = vsub.f32 %v87, %v537
    %v539 = vand.u32 %v538, 4294901760
    %v540 = vsub.f32 %v538, %v539
    %v541 = vand.u32 %v540, 4294901760
    %542 = vmatprep.subr.mxu0 %v541
    %v543 = vand.u32 %v86, 4294901760
    %v544 = vsub.f32 %v86, %v543
    %v545 = vand.u32 %v544, 4294901760
    %v546 = vsub.f32 %v544, %v545
    %v547 = vand.u32 %v546, 4294901760
    %548 = vmatpush2.msra.mxu0 %v547
    %v549 = vand.u32 %v85, 4294901760
    %v550 = vsub.f32 %v85, %v549
    %v551 = vand.u32 %v550, 4294901760
    %v552 = vsub.f32 %v550, %v551
    %v553 = vand.u32 %v552, 4294901760
    %554 = vmatprep.subr.mxu0 %v553
    %v555 = vand.u32 %v84, 4294901760
    %v556 = vsub.f32 %v84, %v555
    %v557 = vand.u32 %v556, 4294901760
    %v558 = vsub.f32 %v556, %v557
    %v559 = vand.u32 %v558, 4294901760
    %560 = vmatpush2.msra.mxu0 %v559
    %v561 = vand.u32 %v83, 4294901760
    %v562 = vsub.f32 %v83, %v561
    %v563 = vand.u32 %v562, 4294901760
    %v564 = vsub.f32 %v562, %v563
    %v565 = vand.u32 %v564, 4294901760
    %566 = vmatprep.subr.mxu0 %v565
    %v567 = vand.u32 %v82, 4294901760
    %v568 = vsub.f32 %v82, %v567
    %v569 = vand.u32 %v568, 4294901760
    %v570 = vsub.f32 %v568, %v569
    %v571 = vand.u32 %v570, 4294901760
    %572 = vmatpush2.msra.mxu0 %v571
    %v573 = vand.u32 %v81, 4294901760
    %v574 = vsub.f32 %v81, %v573
    %v575 = vand.u32 %v574, 4294901760
    %v576 = vsub.f32 %v574, %v575
    %v577 = vand.u32 %v576, 4294901760
    %578 = vmatprep.subr.mxu0 %v577
    %v579 = vand.u32 %v80, 4294901760
    %v580 = vsub.f32 %v80, %v579
    %v581 = vand.u32 %v580, 4294901760
    %v582 = vsub.f32 %v580, %v581
    %v583 = vand.u32 %v582, 4294901760
    %584 = vmatpush2.msra.mxu0 %v583
    %v585 = vand.u32 %v79, 4294901760
    %v586 = vsub.f32 %v79, %v585
    %v587 = vand.u32 %v586, 4294901760
    %v588 = vsub.f32 %v586, %v587
    %v589 = vand.u32 %v588, 4294901760
    %590 = vmatprep.subr.mxu0 %v589
    %v591 = vand.u32 %v78, 4294901760
    %v592 = vsub.f32 %v78, %v591
    %v593 = vand.u32 %v592, 4294901760
    %v594 = vsub.f32 %v592, %v593
    %v595 = vand.u32 %v594, 4294901760
    %596 = vmatpush2.msra.mxu0 %v595
    %v597 = vand.u32 %v77, 4294901760
    %v598 = vsub.f32 %v77, %v597
    %v599 = vand.u32 %v598, 4294901760
    %v600 = vsub.f32 %v598, %v599
    %v601 = vand.u32 %v600, 4294901760
    %602 = vmatprep.subr.mxu0 %v601
    %v603 = vand.u32 %v76, 4294901760
    %v604 = vsub.f32 %v76, %v603
    %v605 = vand.u32 %v604, 4294901760
    %v606 = vsub.f32 %v604, %v605
    %v607 = vand.u32 %v606, 4294901760
    %608 = vmatpush2.msra.mxu0 %v607
    %v609 = vand.u32 %v75, 4294901760
    %v610 = vsub.f32 %v75, %v609
    %v611 = vand.u32 %v610, 4294901760
    %v612 = vsub.f32 %v610, %v611
    %v613 = vand.u32 %v612, 4294901760
    %614 = vmatprep.subr.mxu0 %v613
    %v615 = vand.u32 %v74, 4294901760
    %v616 = vsub.f32 %v74, %v615
    %v617 = vand.u32 %v616, 4294901760
    %v618 = vsub.f32 %v616, %v617
    %v619 = vand.u32 %v618, 4294901760
    %620 = vmatpush2.msra.mxu0 %v619
    %v621 = vand.u32 %v73, 4294901760
    %v622 = vsub.f32 %v73, %v621
    %v623 = vand.u32 %v622, 4294901760
    %v624 = vsub.f32 %v622, %v623
    %v625 = vand.u32 %v624, 4294901760
    %626 = vmatprep.subr.mxu0 %v625
    %v627 = vand.u32 %v72, 4294901760
    %v628 = vsub.f32 %v72, %v627
    %v629 = vand.u32 %v628, 4294901760
    %v630 = vsub.f32 %v628, %v629
    %v631 = vand.u32 %v630, 4294901760
    %632 = vmatpush2.msra.mxu0 %v631
    %v633 = vand.u32 %v39, 4294901760
    %634 = vmatprep.mubr.f32.mxu0 %v633
    %v635 = vand.u32 %v38, 4294901760
    %636 = vmatmul.mubr.f32.gmra.mxu0 %v635
    %v637 = vpop.f32.mrf.mxu0
    %v638 = vadd.f32 %v245, %v637
    %v639 = vpop.f32.mrf.mxu0
    %v640 = vadd.f32 %v247, %v639
    %641 = vdwg.mxu0
    %v642 = vand.u32 %v71, 4294901760
    %v643 = vsub.f32 %v71, %v642
    %644 = vmatprep.subr.mxu0 %v643
    %v645 = vand.u32 %v70, 4294901760
    %v646 = vsub.f32 %v70, %v645
    %647 = vmatpush1.msra.mxu0 %v646
    %v648 = vand.u32 %v69, 4294901760
    %v649 = vsub.f32 %v69, %v648
    %650 = vmatprep.subr.mxu0 %v649
    %v651 = vand.u32 %v68, 4294901760
    %v652 = vsub.f32 %v68, %v651
    %653 = vmatpush1.msra.mxu0 %v652
    %v654 = vand.u32 %v67, 4294901760
    %v655 = vsub.f32 %v67, %v654
    %656 = vmatprep.subr.mxu0 %v655
    %v657 = vand.u32 %v66, 4294901760
    %v658 = vsub.f32 %v66, %v657
    %659 = vmatpush1.msra.mxu0 %v658
    %v660 = vand.u32 %v65, 4294901760
    %v661 = vsub.f32 %v65, %v660
    %662 = vmatprep.subr.mxu0 %v661
    %v663 = vand.u32 %v64, 4294901760
    %v664 = vsub.f32 %v64, %v663
    %665 = vmatpush1.msra.mxu0 %v664
    %v666 = vand.u32 %v63, 4294901760
    %v667 = vsub.f32 %v63, %v666
    %668 = vmatprep.subr.mxu0 %v667
    %v669 = vand.u32 %v62, 4294901760
    %v670 = vsub.f32 %v62, %v669
    %671 = vmatpush1.msra.mxu0 %v670
    %v672 = vand.u32 %v61, 4294901760
    %v673 = vsub.f32 %v61, %v672
    %674 = vmatprep.subr.mxu0 %v673
    %v675 = vand.u32 %v60, 4294901760
    %v676 = vsub.f32 %v60, %v675
    %677 = vmatpush1.msra.mxu0 %v676
    %v678 = vand.u32 %v59, 4294901760
    %v679 = vsub.f32 %v59, %v678
    %680 = vmatprep.subr.mxu0 %v679
    %v681 = vand.u32 %v58, 4294901760
    %v682 = vsub.f32 %v58, %v681
    %683 = vmatpush1.msra.mxu0 %v682
    %v684 = vand.u32 %v57, 4294901760
    %v685 = vsub.f32 %v57, %v684
    %686 = vmatprep.subr.mxu0 %v685
    %v687 = vand.u32 %v56, 4294901760
    %v688 = vsub.f32 %v56, %v687
    %689 = vmatpush1.msra.mxu0 %v688
    %v690 = vand.u32 %v55, 4294901760
    %v691 = vsub.f32 %v55, %v690
    %692 = vmatprep.subr.mxu0 %v691
    %v693 = vand.u32 %v54, 4294901760
    %v694 = vsub.f32 %v54, %v693
    %695 = vmatpush1.msra.mxu0 %v694
    %v696 = vand.u32 %v53, 4294901760
    %v697 = vsub.f32 %v53, %v696
    %698 = vmatprep.subr.mxu0 %v697
    %v699 = vand.u32 %v52, 4294901760
    %v700 = vsub.f32 %v52, %v699
    %701 = vmatpush1.msra.mxu0 %v700
    %v702 = vand.u32 %v51, 4294901760
    %v703 = vsub.f32 %v51, %v702
    %704 = vmatprep.subr.mxu0 %v703
    %v705 = vand.u32 %v50, 4294901760
    %v706 = vsub.f32 %v50, %v705
    %707 = vmatpush1.msra.mxu0 %v706
    %v708 = vand.u32 %v49, 4294901760
    %v709 = vsub.f32 %v49, %v708
    %710 = vmatprep.subr.mxu0 %v709
    %v711 = vand.u32 %v48, 4294901760
    %v712 = vsub.f32 %v48, %v711
    %713 = vmatpush1.msra.mxu0 %v712
    %v714 = vand.u32 %v47, 4294901760
    %v715 = vsub.f32 %v47, %v714
    %716 = vmatprep.subr.mxu0 %v715
    %v717 = vand.u32 %v46, 4294901760
    %v718 = vsub.f32 %v46, %v717
    %719 = vmatpush1.msra.mxu0 %v718
    %v720 = vand.u32 %v45, 4294901760
    %v721 = vsub.f32 %v45, %v720
    %722 = vmatprep.subr.mxu0 %v721
    %v723 = vand.u32 %v44, 4294901760
    %v724 = vsub.f32 %v44, %v723
    %725 = vmatpush1.msra.mxu0 %v724
    %v726 = vand.u32 %v43, 4294901760
    %v727 = vsub.f32 %v43, %v726
    %728 = vmatprep.subr.mxu0 %v727
    %v729 = vand.u32 %v42, 4294901760
    %v730 = vsub.f32 %v42, %v729
    %731 = vmatpush1.msra.mxu0 %v730
    %v732 = vand.u32 %v41, 4294901760
    %v733 = vsub.f32 %v41, %v732
    %734 = vmatprep.subr.mxu0 %v733
    %v735 = vand.u32 %v40, 4294901760
    %v736 = vsub.f32 %v40, %v735
    %737 = vmatpush1.msra.mxu0 %v736
    %v738 = vand.u32 %v103, 4294901760
    %v739 = vsub.f32 %v103, %v738
    %740 = vmatprep.subr.mxu0 %v739
    %v741 = vand.u32 %v102, 4294901760
    %v742 = vsub.f32 %v102, %v741
    %743 = vmatpush2.msra.mxu0 %v742
    %v744 = vand.u32 %v101, 4294901760
    %v745 = vsub.f32 %v101, %v744
    %746 = vmatprep.subr.mxu0 %v745
    %v747 = vand.u32 %v100, 4294901760
    %v748 = vsub.f32 %v100, %v747
    %749 = vmatpush2.msra.mxu0 %v748
    %v750 = vand.u32 %v99, 4294901760
    %v751 = vsub.f32 %v99, %v750
    %752 = vmatprep.subr.mxu0 %v751
    %v753 = vand.u32 %v98, 4294901760
    %v754 = vsub.f32 %v98, %v753
    %755 = vmatpush2.msra.mxu0 %v754
    %v756 = vand.u32 %v97, 4294901760
    %v757 = vsub.f32 %v97, %v756
    %758 = vmatprep.subr.mxu0 %v757
    %v759 = vand.u32 %v96, 4294901760
    %v760 = vsub.f32 %v96, %v759
    %761 = vmatpush2.msra.mxu0 %v760
    %v762 = vand.u32 %v95, 4294901760
    %v763 = vsub.f32 %v95, %v762
    %764 = vmatprep.subr.mxu0 %v763
    %v765 = vand.u32 %v94, 4294901760
    %v766 = vsub.f32 %v94, %v765
    %767 = vmatpush2.msra.mxu0 %v766
    %v768 = vand.u32 %v93, 4294901760
    %v769 = vsub.f32 %v93, %v768
    %770 = vmatprep.subr.mxu0 %v769
    %v771 = vand.u32 %v92, 4294901760
    %v772 = vsub.f32 %v92, %v771
    %773 = vmatpush2.msra.mxu0 %v772
    %v774 = vand.u32 %v91, 4294901760
    %v775 = vsub.f32 %v91, %v774
    %776 = vmatprep.subr.mxu0 %v775
    %v777 = vand.u32 %v90, 4294901760
    %v778 = vsub.f32 %v90, %v777
    %779 = vmatpush2.msra.mxu0 %v778
    %v780 = vand.u32 %v89, 4294901760
    %v781 = vsub.f32 %v89, %v780
    %782 = vmatprep.subr.mxu0 %v781
    %v783 = vand.u32 %v88, 4294901760
    %v784 = vsub.f32 %v88, %v783
    %785 = vmatpush2.msra.mxu0 %v784
    %v786 = vand.u32 %v87, 4294901760
    %v787 = vsub.f32 %v87, %v786
    %788 = vmatprep.subr.mxu0 %v787
    %v789 = vand.u32 %v86, 4294901760
    %v790 = vsub.f32 %v86, %v789
    %791 = vmatpush2.msra.mxu0 %v790
    %v792 = vand.u32 %v85, 4294901760
    %v793 = vsub.f32 %v85, %v792
    %794 = vmatprep.subr.mxu0 %v793
    %v795 = vand.u32 %v84, 4294901760
    %v796 = vsub.f32 %v84, %v795
    %797 = vmatpush2.msra.mxu0 %v796
    %v798 = vand.u32 %v83, 4294901760
    %v799 = vsub.f32 %v83, %v798
    %800 = vmatprep.subr.mxu0 %v799
    %v801 = vand.u32 %v82, 4294901760
    %v802 = vsub.f32 %v82, %v801
    %803 = vmatpush2.msra.mxu0 %v802
    %v804 = vand.u32 %v81, 4294901760
    %v805 = vsub.f32 %v81, %v804
    %806 = vmatprep.subr.mxu0 %v805
    %v807 = vand.u32 %v80, 4294901760
    %v808 = vsub.f32 %v80, %v807
    %809 = vmatpush2.msra.mxu0 %v808
    %v810 = vand.u32 %v79, 4294901760
    %v811 = vsub.f32 %v79, %v810
    %812 = vmatprep.subr.mxu0 %v811
    %v813 = vand.u32 %v78, 4294901760
    %v814 = vsub.f32 %v78, %v813
    %815 = vmatpush2.msra.mxu0 %v814
    %v816 = vand.u32 %v77, 4294901760
    %v817 = vsub.f32 %v77, %v816
    %818 = vmatprep.subr.mxu0 %v817
    %v819 = vand.u32 %v76, 4294901760
    %v820 = vsub.f32 %v76, %v819
    %821 = vmatpush2.msra.mxu0 %v820
    %v822 = vand.u32 %v75, 4294901760
    %v823 = vsub.f32 %v75, %v822
    %824 = vmatprep.subr.mxu0 %v823
    %v825 = vand.u32 %v74, 4294901760
    %v826 = vsub.f32 %v74, %v825
    %827 = vmatpush2.msra.mxu0 %v826
    %v828 = vand.u32 %v73, 4294901760
    %v829 = vsub.f32 %v73, %v828
    %830 = vmatprep.subr.mxu0 %v829
    %v831 = vand.u32 %v72, 4294901760
    %v832 = vsub.f32 %v72, %v831
    %833 = vmatpush2.msra.mxu0 %v832
    %v834 = vand.u32 %v39, 4294901760
    %v835 = vsub.f32 %v39, %v834
    %836 = vmatprep.mubr.f32.mxu0 %v835
    %v837 = vand.u32 %v38, 4294901760
    %v838 = vsub.f32 %v38, %v837
    %839 = vmatmul.mubr.f32.gmra.mxu0 %v838
    %v840 = vpop.f32.mrf.mxu0
    %v841 = vadd.f32 %v638, %v840
    %v842 = vpop.f32.mrf.mxu0
    %v843 = vadd.f32 %v640, %v842
    %844 = vdwg.mxu0
    %v845 = vand.u32 %v71, 4294901760
    %846 = vmatprep.subr.mxu0 %v845
    %v847 = vand.u32 %v70, 4294901760
    %848 = vmatpush1.msra.mxu0 %v847
    %v849 = vand.u32 %v69, 4294901760
    %850 = vmatprep.subr.mxu0 %v849
    %v851 = vand.u32 %v68, 4294901760
    %852 = vmatpush1.msra.mxu0 %v851
    %v853 = vand.u32 %v67, 4294901760
    %854 = vmatprep.subr.mxu0 %v853
    %v855 = vand.u32 %v66, 4294901760
    %856 = vmatpush1.msra.mxu0 %v855
    %v857 = vand.u32 %v65, 4294901760
    %858 = vmatprep.subr.mxu0 %v857
    %v859 = vand.u32 %v64, 4294901760
    %860 = vmatpush1.msra.mxu0 %v859
    %v861 = vand.u32 %v63, 4294901760
    %862 = vmatprep.subr.mxu0 %v861
    %v863 = vand.u32 %v62, 4294901760
    %864 = vmatpush1.msra.mxu0 %v863
    %v865 = vand.u32 %v61, 4294901760
    %866 = vmatprep.subr.mxu0 %v865
    %v867 = vand.u32 %v60, 4294901760
    %868 = vmatpush1.msra.mxu0 %v867
    %v869 = vand.u32 %v59, 4294901760
    %870 = vmatprep.subr.mxu0 %v869
    %v871 = vand.u32 %v58, 4294901760
    %872 = vmatpush1.msra.mxu0 %v871
    %v873 = vand.u32 %v57, 4294901760
    %874 = vmatprep.subr.mxu0 %v873
    %v875 = vand.u32 %v56, 4294901760
    %876 = vmatpush1.msra.mxu0 %v875
    %v877 = vand.u32 %v55, 4294901760
    %878 = vmatprep.subr.mxu0 %v877
    %v879 = vand.u32 %v54, 4294901760
    %880 = vmatpush1.msra.mxu0 %v879
    %v881 = vand.u32 %v53, 4294901760
    %882 = vmatprep.subr.mxu0 %v881
    %v883 = vand.u32 %v52, 4294901760
    %884 = vmatpush1.msra.mxu0 %v883
    %v885 = vand.u32 %v51, 4294901760
    %886 = vmatprep.subr.mxu0 %v885
    %v887 = vand.u32 %v50, 4294901760
    %888 = vmatpush1.msra.mxu0 %v887
    %v889 = vand.u32 %v49, 4294901760
    %890 = vmatprep.subr.mxu0 %v889
    %v891 = vand.u32 %v48, 4294901760
    %892 = vmatpush1.msra.mxu0 %v891
    %v893 = vand.u32 %v47, 4294901760
    %894 = vmatprep.subr.mxu0 %v893
    %v895 = vand.u32 %v46, 4294901760
    %896 = vmatpush1.msra.mxu0 %v895
    %v897 = vand.u32 %v45, 4294901760
    %898 = vmatprep.subr.mxu0 %v897
    %v899 = vand.u32 %v44, 4294901760
    %900 = vmatpush1.msra.mxu0 %v899
    %v901 = vand.u32 %v43, 4294901760
    %902 = vmatprep.subr.mxu0 %v901
    %v903 = vand.u32 %v42, 4294901760
    %904 = vmatpush1.msra.mxu0 %v903
    %v905 = vand.u32 %v41, 4294901760
    %906 = vmatprep.subr.mxu0 %v905
    %v907 = vand.u32 %v40, 4294901760
    %908 = vmatpush1.msra.mxu0 %v907
    %v909 = vand.u32 %v103, 4294901760
    %910 = vmatprep.subr.mxu0 %v909
    %v911 = vand.u32 %v102, 4294901760
    %912 = vmatpush2.msra.mxu0 %v911
    %v913 = vand.u32 %v101, 4294901760
    %914 = vmatprep.subr.mxu0 %v913
    %v915 = vand.u32 %v100, 4294901760
    %916 = vmatpush2.msra.mxu0 %v915
    %v917 = vand.u32 %v99, 4294901760
    %918 = vmatprep.subr.mxu0 %v917
    %v919 = vand.u32 %v98, 4294901760
    %920 = vmatpush2.msra.mxu0 %v919
    %v921 = vand.u32 %v97, 4294901760
    %922 = vmatprep.subr.mxu0 %v921
    %v923 = vand.u32 %v96, 4294901760
    %924 = vmatpush2.msra.mxu0 %v923
    %v925 = vand.u32 %v95, 4294901760
    %926 = vmatprep.subr.mxu0 %v925
    %v927 = vand.u32 %v94, 4294901760
    %928 = vmatpush2.msra.mxu0 %v927
    %v929 = vand.u32 %v93, 4294901760
    %930 = vmatprep.subr.mxu0 %v929
    %v931 = vand.u32 %v92, 4294901760
    %932 = vmatpush2.msra.mxu0 %v931
    %v933 = vand.u32 %v91, 4294901760
    %934 = vmatprep.subr.mxu0 %v933
    %v935 = vand.u32 %v90, 4294901760
    %936 = vmatpush2.msra.mxu0 %v935
    %v937 = vand.u32 %v89, 4294901760
    %938 = vmatprep.subr.mxu0 %v937
    %v939 = vand.u32 %v88, 4294901760
    %940 = vmatpush2.msra.mxu0 %v939
    %v941 = vand.u32 %v87, 4294901760
    %942 = vmatprep.subr.mxu0 %v941
    %v943 = vand.u32 %v86, 4294901760
    %944 = vmatpush2.msra.mxu0 %v943
    %v945 = vand.u32 %v85, 4294901760
    %946 = vmatprep.subr.mxu0 %v945
    %v947 = vand.u32 %v84, 4294901760
    %948 = vmatpush2.msra.mxu0 %v947
    %v949 = vand.u32 %v83, 4294901760
    %950 = vmatprep.subr.mxu0 %v949
    %v951 = vand.u32 %v82, 4294901760
    %952 = vmatpush2.msra.mxu0 %v951
    %v953 = vand.u32 %v81, 4294901760
    %954 = vmatprep.subr.mxu0 %v953
    %v955 = vand.u32 %v80, 4294901760
    %956 = vmatpush2.msra.mxu0 %v955
    %v957 = vand.u32 %v79, 4294901760
    %958 = vmatprep.subr.mxu0 %v957
    %v959 = vand.u32 %v78, 4294901760
    %960 = vmatpush2.msra.mxu0 %v959
    %v961 = vand.u32 %v77, 4294901760
    %962 = vmatprep.subr.mxu0 %v961
    %v963 = vand.u32 %v76, 4294901760
    %964 = vmatpush2.msra.mxu0 %v963
    %v965 = vand.u32 %v75, 4294901760
    %966 = vmatprep.subr.mxu0 %v965
    %v967 = vand.u32 %v74, 4294901760
    %968 = vmatpush2.msra.mxu0 %v967
    %v969 = vand.u32 %v73, 4294901760
    %970 = vmatprep.subr.mxu0 %v969
    %v971 = vand.u32 %v72, 4294901760
    %972 = vmatpush2.msra.mxu0 %v971
    %v973 = vand.u32 %v39, 4294901760
    %v974 = vsub.f32 %v39, %v973
    %v975 = vand.u32 %v974, 4294901760
    %976 = vmatprep.mubr.f32.mxu0 %v975
    %v977 = vand.u32 %v38, 4294901760
    %v978 = vsub.f32 %v38, %v977
    %v979 = vand.u32 %v978, 4294901760
    %980 = vmatmul.mubr.f32.gmra.mxu0 %v979
    %v981 = vpop.f32.mrf.mxu0
    %v982 = vadd.f32 %v841, %v981
    %v983 = vpop.f32.mrf.mxu0
    %v984 = vadd.f32 %v843, %v983
    %985 = vdwg.mxu0
    %v986 = vand.u32 %v71, 4294901760
    %v987 = vsub.f32 %v71, %v986
    %v988 = vand.u32 %v987, 4294901760
    %989 = vmatprep.subr.mxu0 %v988
    %v990 = vand.u32 %v70, 4294901760
    %v991 = vsub.f32 %v70, %v990
    %v992 = vand.u32 %v991, 4294901760
    %993 = vmatpush1.msra.mxu0 %v992
    %v994 = vand.u32 %v69, 4294901760
    %v995 = vsub.f32 %v69, %v994
    %v996 = vand.u32 %v995, 4294901760
    %997 = vmatprep.subr.mxu0 %v996
    %v998 = vand.u32 %v68, 4294901760
    %v999 = vsub.f32 %v68, %v998
    %v1000 = vand.u32 %v999, 4294901760
    %1001 = vmatpush1.msra.mxu0 %v1000
    %v1002 = vand.u32 %v67, 4294901760
    %v1003 = vsub.f32 %v67, %v1002
    %v1004 = vand.u32 %v1003, 4294901760
    %1005 = vmatprep.subr.mxu0 %v1004
    %v1006 = vand.u32 %v66, 4294901760
    %v1007 = vsub.f32 %v66, %v1006
    %v1008 = vand.u32 %v1007, 4294901760
    %1009 = vmatpush1.msra.mxu0 %v1008
    %v1010 = vand.u32 %v65, 4294901760
    %v1011 = vsub.f32 %v65, %v1010
    %v1012 = vand.u32 %v1011, 4294901760
    %1013 = vmatprep.subr.mxu0 %v1012
    %v1014 = vand.u32 %v64, 4294901760
    %v1015 = vsub.f32 %v64, %v1014
    %v1016 = vand.u32 %v1015, 4294901760
    %1017 = vmatpush1.msra.mxu0 %v1016
    %v1018 = vand.u32 %v63, 4294901760
    %v1019 = vsub.f32 %v63, %v1018
    %v1020 = vand.u32 %v1019, 4294901760
    %1021 = vmatprep.subr.mxu0 %v1020
    %v1022 = vand.u32 %v62, 4294901760
    %v1023 = vsub.f32 %v62, %v1022
    %v1024 = vand.u32 %v1023, 4294901760
    %1025 = vmatpush1.msra.mxu0 %v1024
    %v1026 = vand.u32 %v61, 4294901760
    %v1027 = vsub.f32 %v61, %v1026
    %v1028 = vand.u32 %v1027, 4294901760
    %1029 = vmatprep.subr.mxu0 %v1028
    %v1030 = vand.u32 %v60, 4294901760
    %v1031 = vsub.f32 %v60, %v1030
    %v1032 = vand.u32 %v1031, 4294901760
    %1033 = vmatpush1.msra.mxu0 %v1032
    %v1034 = vand.u32 %v59, 4294901760
    %v1035 = vsub.f32 %v59, %v1034
    %v1036 = vand.u32 %v1035, 4294901760
    %1037 = vmatprep.subr.mxu0 %v1036
    %v1038 = vand.u32 %v58, 4294901760
    %v1039 = vsub.f32 %v58, %v1038
    %v1040 = vand.u32 %v1039, 4294901760
    %1041 = vmatpush1.msra.mxu0 %v1040
    %v1042 = vand.u32 %v57, 4294901760
    %v1043 = vsub.f32 %v57, %v1042
    %v1044 = vand.u32 %v1043, 4294901760
    %1045 = vmatprep.subr.mxu0 %v1044
    %v1046 = vand.u32 %v56, 4294901760
    %v1047 = vsub.f32 %v56, %v1046
    %v1048 = vand.u32 %v1047, 4294901760
    %1049 = vmatpush1.msra.mxu0 %v1048
    %v1050 = vand.u32 %v55, 4294901760
    %v1051 = vsub.f32 %v55, %v1050
    %v1052 = vand.u32 %v1051, 4294901760
    %1053 = vmatprep.subr.mxu0 %v1052
    %v1054 = vand.u32 %v54, 4294901760
    %v1055 = vsub.f32 %v54, %v1054
    %v1056 = vand.u32 %v1055, 4294901760
    %1057 = vmatpush1.msra.mxu0 %v1056
    %v1058 = vand.u32 %v53, 4294901760
    %v1059 = vsub.f32 %v53, %v1058
    %v1060 = vand.u32 %v1059, 4294901760
    %1061 = vmatprep.subr.mxu0 %v1060
    %v1062 = vand.u32 %v52, 4294901760
    %v1063 = vsub.f32 %v52, %v1062
    %v1064 = vand.u32 %v1063, 4294901760
    %1065 = vmatpush1.msra.mxu0 %v1064
    %v1066 = vand.u32 %v51, 4294901760
    %v1067 = vsub.f32 %v51, %v1066
    %v1068 = vand.u32 %v1067, 4294901760
    %1069 = vmatprep.subr.mxu0 %v1068
    %v1070 = vand.u32 %v50, 4294901760
    %v1071 = vsub.f32 %v50, %v1070
    %v1072 = vand.u32 %v1071, 4294901760
    %1073 = vmatpush1.msra.mxu0 %v1072
    %v1074 = vand.u32 %v49, 4294901760
    %v1075 = vsub.f32 %v49, %v1074
    %v1076 = vand.u32 %v1075, 4294901760
    %1077 = vmatprep.subr.mxu0 %v1076
    %v1078 = vand.u32 %v48, 4294901760
    %v1079 = vsub.f32 %v48, %v1078
    %v1080 = vand.u32 %v1079, 4294901760
    %1081 = vmatpush1.msra.mxu0 %v1080
    %v1082 = vand.u32 %v47, 4294901760
    %v1083 = vsub.f32 %v47, %v1082
    %v1084 = vand.u32 %v1083, 4294901760
    %1085 = vmatprep.subr.mxu0 %v1084
    %v1086 = vand.u32 %v46, 4294901760
    %v1087 = vsub.f32 %v46, %v1086
    %v1088 = vand.u32 %v1087, 4294901760
    %1089 = vmatpush1.msra.mxu0 %v1088
    %v1090 = vand.u32 %v45, 4294901760
    %v1091 = vsub.f32 %v45, %v1090
    %v1092 = vand.u32 %v1091, 4294901760
    %1093 = vmatprep.subr.mxu0 %v1092
    %v1094 = vand.u32 %v44, 4294901760
    %v1095 = vsub.f32 %v44, %v1094
    %v1096 = vand.u32 %v1095, 4294901760
    %1097 = vmatpush1.msra.mxu0 %v1096
    %v1098 = vand.u32 %v43, 4294901760
    %v1099 = vsub.f32 %v43, %v1098
    %v1100 = vand.u32 %v1099, 4294901760
    %1101 = vmatprep.subr.mxu0 %v1100
    %v1102 = vand.u32 %v42, 4294901760
    %v1103 = vsub.f32 %v42, %v1102
    %v1104 = vand.u32 %v1103, 4294901760
    %1105 = vmatpush1.msra.mxu0 %v1104
    %v1106 = vand.u32 %v41, 4294901760
    %v1107 = vsub.f32 %v41, %v1106
    %v1108 = vand.u32 %v1107, 4294901760
    %1109 = vmatprep.subr.mxu0 %v1108
    %v1110 = vand.u32 %v40, 4294901760
    %v1111 = vsub.f32 %v40, %v1110
    %v1112 = vand.u32 %v1111, 4294901760
    %1113 = vmatpush1.msra.mxu0 %v1112
    %v1114 = vand.u32 %v103, 4294901760
    %v1115 = vsub.f32 %v103, %v1114
    %v1116 = vand.u32 %v1115, 4294901760
    %1117 = vmatprep.subr.mxu0 %v1116
    %v1118 = vand.u32 %v102, 4294901760
    %v1119 = vsub.f32 %v102, %v1118
    %v1120 = vand.u32 %v1119, 4294901760
    %1121 = vmatpush2.msra.mxu0 %v1120
    %v1122 = vand.u32 %v101, 4294901760
    %v1123 = vsub.f32 %v101, %v1122
    %v1124 = vand.u32 %v1123, 4294901760
    %1125 = vmatprep.subr.mxu0 %v1124
    %v1126 = vand.u32 %v100, 4294901760
    %v1127 = vsub.f32 %v100, %v1126
    %v1128 = vand.u32 %v1127, 4294901760
    %1129 = vmatpush2.msra.mxu0 %v1128
    %v1130 = vand.u32 %v99, 4294901760
    %v1131 = vsub.f32 %v99, %v1130
    %v1132 = vand.u32 %v1131, 4294901760
    %1133 = vmatprep.subr.mxu0 %v1132
    %v1134 = vand.u32 %v98, 4294901760
    %v1135 = vsub.f32 %v98, %v1134
    %v1136 = vand.u32 %v1135, 4294901760
    %1137 = vmatpush2.msra.mxu0 %v1136
    %v1138 = vand.u32 %v97, 4294901760
    %v1139 = vsub.f32 %v97, %v1138
    %v1140 = vand.u32 %v1139, 4294901760
    %1141 = vmatprep.subr.mxu0 %v1140
    %v1142 = vand.u32 %v96, 4294901760
    %v1143 = vsub.f32 %v96, %v1142
    %v1144 = vand.u32 %v1143, 4294901760
    %1145 = vmatpush2.msra.mxu0 %v1144
    %v1146 = vand.u32 %v95, 4294901760
    %v1147 = vsub.f32 %v95, %v1146
    %v1148 = vand.u32 %v1147, 4294901760
    %1149 = vmatprep.subr.mxu0 %v1148
    %v1150 = vand.u32 %v94, 4294901760
    %v1151 = vsub.f32 %v94, %v1150
    %v1152 = vand.u32 %v1151, 4294901760
    %1153 = vmatpush2.msra.mxu0 %v1152
    %v1154 = vand.u32 %v93, 4294901760
    %v1155 = vsub.f32 %v93, %v1154
    %v1156 = vand.u32 %v1155, 4294901760
    %1157 = vmatprep.subr.mxu0 %v1156
    %v1158 = vand.u32 %v92, 4294901760
    %v1159 = vsub.f32 %v92, %v1158
    %v1160 = vand.u32 %v1159, 4294901760
    %1161 = vmatpush2.msra.mxu0 %v1160
    %v1162 = vand.u32 %v91, 4294901760
    %v1163 = vsub.f32 %v91, %v1162
    %v1164 = vand.u32 %v1163, 4294901760
    %1165 = vmatprep.subr.mxu0 %v1164
    %v1166 = vand.u32 %v90, 4294901760
    %v1167 = vsub.f32 %v90, %v1166
    %v1168 = vand.u32 %v1167, 4294901760
    %1169 = vmatpush2.msra.mxu0 %v1168
    %v1170 = vand.u32 %v89, 4294901760
    %v1171 = vsub.f32 %v89, %v1170
    %v1172 = vand.u32 %v1171, 4294901760
    %1173 = vmatprep.subr.mxu0 %v1172
    %v1174 = vand.u32 %v88, 4294901760
    %v1175 = vsub.f32 %v88, %v1174
    %v1176 = vand.u32 %v1175, 4294901760
    %1177 = vmatpush2.msra.mxu0 %v1176
    %v1178 = vand.u32 %v87, 4294901760
    %v1179 = vsub.f32 %v87, %v1178
    %v1180 = vand.u32 %v1179, 4294901760
    %1181 = vmatprep.subr.mxu0 %v1180
    %v1182 = vand.u32 %v86, 4294901760
    %v1183 = vsub.f32 %v86, %v1182
    %v1184 = vand.u32 %v1183, 4294901760
    %1185 = vmatpush2.msra.mxu0 %v1184
    %v1186 = vand.u32 %v85, 4294901760
    %v1187 = vsub.f32 %v85, %v1186
    %v1188 = vand.u32 %v1187, 4294901760
    %1189 = vmatprep.subr.mxu0 %v1188
    %v1190 = vand.u32 %v84, 4294901760
    %v1191 = vsub.f32 %v84, %v1190
    %v1192 = vand.u32 %v1191, 4294901760
    %1193 = vmatpush2.msra.mxu0 %v1192
    %v1194 = vand.u32 %v83, 4294901760
    %v1195 = vsub.f32 %v83, %v1194
    %v1196 = vand.u32 %v1195, 4294901760
    %1197 = vmatprep.subr.mxu0 %v1196
    %v1198 = vand.u32 %v82, 4294901760
    %v1199 = vsub.f32 %v82, %v1198
    %v1200 = vand.u32 %v1199, 4294901760
    %1201 = vmatpush2.msra.mxu0 %v1200
    %v1202 = vand.u32 %v81, 4294901760
    %v1203 = vsub.f32 %v81, %v1202
    %v1204 = vand.u32 %v1203, 4294901760
    %1205 = vmatprep.subr.mxu0 %v1204
    %v1206 = vand.u32 %v80, 4294901760
    %v1207 = vsub.f32 %v80, %v1206
    %v1208 = vand.u32 %v1207, 4294901760
    %1209 = vmatpush2.msra.mxu0 %v1208
    %v1210 = vand.u32 %v79, 4294901760
    %v1211 = vsub.f32 %v79, %v1210
    %v1212 = vand.u32 %v1211, 4294901760
    %1213 = vmatprep.subr.mxu0 %v1212
    %v1214 = vand.u32 %v78, 4294901760
    %v1215 = vsub.f32 %v78, %v1214
    %v1216 = vand.u32 %v1215, 4294901760
    %1217 = vmatpush2.msra.mxu0 %v1216
    %v1218 = vand.u32 %v77, 4294901760
    %v1219 = vsub.f32 %v77, %v1218
    %v1220 = vand.u32 %v1219, 4294901760
    %1221 = vmatprep.subr.mxu0 %v1220
    %v1222 = vand.u32 %v76, 4294901760
    %v1223 = vsub.f32 %v76, %v1222
    %v1224 = vand.u32 %v1223, 4294901760
    %1225 = vmatpush2.msra.mxu0 %v1224
    %v1226 = vand.u32 %v75, 4294901760
    %v1227 = vsub.f32 %v75, %v1226
    %v1228 = vand.u32 %v1227, 4294901760
    %1229 = vmatprep.subr.mxu0 %v1228
    %v1230 = vand.u32 %v74, 4294901760
    %v1231 = vsub.f32 %v74, %v1230
    %v1232 = vand.u32 %v1231, 4294901760
    %1233 = vmatpush2.msra.mxu0 %v1232
    %v1234 = vand.u32 %v73, 4294901760
    %v1235 = vsub.f32 %v73, %v1234
    %v1236 = vand.u32 %v1235, 4294901760
    %1237 = vmatprep.subr.mxu0 %v1236
    %v1238 = vand.u32 %v72, 4294901760
    %v1239 = vsub.f32 %v72, %v1238
    %v1240 = vand.u32 %v1239, 4294901760
    %1241 = vmatpush2.msra.mxu0 %v1240
    %v1242 = vand.u32 %v39, 4294901760
    %1243 = vmatprep.mubr.f32.mxu0 %v1242
    %v1244 = vand.u32 %v38, 4294901760
    %1245 = vmatmul.mubr.f32.gmra.mxu0 %v1244
    %v1246 = vpop.f32.mrf.mxu0
    %v1247 = vadd.f32 %v982, %v1246
    %v1248 = vpop.f32.mrf.mxu0
    %v1249 = vadd.f32 %v984, %v1248
    %1250 = vdwg.mxu0
    %v1251 = vand.u32 %v71, 4294901760
    %1252 = vmatprep.subr.mxu0 %v1251
    %v1253 = vand.u32 %v70, 4294901760
    %1254 = vmatpush1.msra.mxu0 %v1253
    %v1255 = vand.u32 %v69, 4294901760
    %1256 = vmatprep.subr.mxu0 %v1255
    %v1257 = vand.u32 %v68, 4294901760
    %1258 = vmatpush1.msra.mxu0 %v1257
    %v1259 = vand.u32 %v67, 4294901760
    %1260 = vmatprep.subr.mxu0 %v1259
    %v1261 = vand.u32 %v66, 4294901760
    %1262 = vmatpush1.msra.mxu0 %v1261
    %v1263 = vand.u32 %v65, 4294901760
    %1264 = vmatprep.subr.mxu0 %v1263
    %v1265 = vand.u32 %v64, 4294901760
    %1266 = vmatpush1.msra.mxu0 %v1265
    %v1267 = vand.u32 %v63, 4294901760
    %1268 = vmatprep.subr.mxu0 %v1267
    %v1269 = vand.u32 %v62, 4294901760
    %1270 = vmatpush1.msra.mxu0 %v1269
    %v1271 = vand.u32 %v61, 4294901760
    %1272 = vmatprep.subr.mxu0 %v1271
    %v1273 = vand.u32 %v60, 4294901760
    %1274 = vmatpush1.msra.mxu0 %v1273
    %v1275 = vand.u32 %v59, 4294901760
    %1276 = vmatprep.subr.mxu0 %v1275
    %v1277 = vand.u32 %v58, 4294901760
    %1278 = vmatpush1.msra.mxu0 %v1277
    %v1279 = vand.u32 %v57, 4294901760
    %1280 = vmatprep.subr.mxu0 %v1279
    %v1281 = vand.u32 %v56, 4294901760
    %1282 = vmatpush1.msra.mxu0 %v1281
    %v1283 = vand.u32 %v55, 4294901760
    %1284 = vmatprep.subr.mxu0 %v1283
    %v1285 = vand.u32 %v54, 4294901760
    %1286 = vmatpush1.msra.mxu0 %v1285
    %v1287 = vand.u32 %v53, 4294901760
    %1288 = vmatprep.subr.mxu0 %v1287
    %v1289 = vand.u32 %v52, 4294901760
    %1290 = vmatpush1.msra.mxu0 %v1289
    %v1291 = vand.u32 %v51, 4294901760
    %1292 = vmatprep.subr.mxu0 %v1291
    %v1293 = vand.u32 %v50, 4294901760
    %1294 = vmatpush1.msra.mxu0 %v1293
    %v1295 = vand.u32 %v49, 4294901760
    %1296 = vmatprep.subr.mxu0 %v1295
    %v1297 = vand.u32 %v48, 4294901760
    %1298 = vmatpush1.msra.mxu0 %v1297
    %v1299 = vand.u32 %v47, 4294901760
    %1300 = vmatprep.subr.mxu0 %v1299
    %v1301 = vand.u32 %v46, 4294901760
    %1302 = vmatpush1.msra.mxu0 %v1301
    %v1303 = vand.u32 %v45, 4294901760
    %1304 = vmatprep.subr.mxu0 %v1303
    %v1305 = vand.u32 %v44, 4294901760
    %1306 = vmatpush1.msra.mxu0 %v1305
    %v1307 = vand.u32 %v43, 4294901760
    %1308 = vmatprep.subr.mxu0 %v1307
    %v1309 = vand.u32 %v42, 4294901760
    %1310 = vmatpush1.msra.mxu0 %v1309
    %v1311 = vand.u32 %v41, 4294901760
    %1312 = vmatprep.subr.mxu0 %v1311
    %v1313 = vand.u32 %v40, 4294901760
    %1314 = vmatpush1.msra.mxu0 %v1313
    %v1315 = vand.u32 %v103, 4294901760
    %1316 = vmatprep.subr.mxu0 %v1315
    %v1317 = vand.u32 %v102, 4294901760
    %1318 = vmatpush2.msra.mxu0 %v1317
    %v1319 = vand.u32 %v101, 4294901760
    %1320 = vmatprep.subr.mxu0 %v1319
    %v1321 = vand.u32 %v100, 4294901760
    %1322 = vmatpush2.msra.mxu0 %v1321
    %v1323 = vand.u32 %v99, 4294901760
    %1324 = vmatprep.subr.mxu0 %v1323
    %v1325 = vand.u32 %v98, 4294901760
    %1326 = vmatpush2.msra.mxu0 %v1325
    %v1327 = vand.u32 %v97, 4294901760
    %1328 = vmatprep.subr.mxu0 %v1327
    %v1329 = vand.u32 %v96, 4294901760
    %1330 = vmatpush2.msra.mxu0 %v1329
    %v1331 = vand.u32 %v95, 4294901760
    %1332 = vmatprep.subr.mxu0 %v1331
    %v1333 = vand.u32 %v94, 4294901760
    %1334 = vmatpush2.msra.mxu0 %v1333
    %v1335 = vand.u32 %v93, 4294901760
    %1336 = vmatprep.subr.mxu0 %v1335
    %v1337 = vand.u32 %v92, 4294901760
    %1338 = vmatpush2.msra.mxu0 %v1337
    %v1339 = vand.u32 %v91, 4294901760
    %1340 = vmatprep.subr.mxu0 %v1339
    %v1341 = vand.u32 %v90, 4294901760
    %1342 = vmatpush2.msra.mxu0 %v1341
    %v1343 = vand.u32 %v89, 4294901760
    %1344 = vmatprep.subr.mxu0 %v1343
    %v1345 = vand.u32 %v88, 4294901760
    %1346 = vmatpush2.msra.mxu0 %v1345
    %v1347 = vand.u32 %v87, 4294901760
    %1348 = vmatprep.subr.mxu0 %v1347
    %v1349 = vand.u32 %v86, 4294901760
    %1350 = vmatpush2.msra.mxu0 %v1349
    %v1351 = vand.u32 %v85, 4294901760
    %1352 = vmatprep.subr.mxu0 %v1351
    %v1353 = vand.u32 %v84, 4294901760
    %1354 = vmatpush2.msra.mxu0 %v1353
    %v1355 = vand.u32 %v83, 4294901760
    %1356 = vmatprep.subr.mxu0 %v1355
    %v1357 = vand.u32 %v82, 4294901760
    %1358 = vmatpush2.msra.mxu0 %v1357
    %v1359 = vand.u32 %v81, 4294901760
    %1360 = vmatprep.subr.mxu0 %v1359
    %v1361 = vand.u32 %v80, 4294901760
    %1362 = vmatpush2.msra.mxu0 %v1361
    %v1363 = vand.u32 %v79, 4294901760
    %1364 = vmatprep.subr.mxu0 %v1363
    %v1365 = vand.u32 %v78, 4294901760
    %1366 = vmatpush2.msra.mxu0 %v1365
    %v1367 = vand.u32 %v77, 4294901760
    %1368 = vmatprep.subr.mxu0 %v1367
    %v1369 = vand.u32 %v76, 4294901760
    %1370 = vmatpush2.msra.mxu0 %v1369
    %v1371 = vand.u32 %v75, 4294901760
    %1372 = vmatprep.subr.mxu0 %v1371
    %v1373 = vand.u32 %v74, 4294901760
    %1374 = vmatpush2.msra.mxu0 %v1373
    %v1375 = vand.u32 %v73, 4294901760
    %1376 = vmatprep.subr.mxu0 %v1375
    %v1377 = vand.u32 %v72, 4294901760
    %1378 = vmatpush2.msra.mxu0 %v1377
    %v1379 = vand.u32 %v39, 4294901760
    %1380 = vmatprep.mubr.f32.mxu0 %v1379
    %v1381 = vand.u32 %v38, 4294901760
    %1382 = vmatmul.mubr.f32.gmra.mxu0 %v1381
    %v1383 = vpop.f32.mrf.mxu0
    %v1384 = vadd.f32 %v1247, %v1383
    %v1385 = vpop.f32.mrf.mxu0
    %v1386 = vadd.f32 %v1249, %v1385
    %1387 = vdwg.mxu0
    %1388 = vst [vmem:[#allocation7] sm:$0xff] %v1384
    %1389 = vst [vmem:[#allocation7 + $0x8] sm:$0xff] %v1386
    // Predicated region
    $region18: #{tpu_custom_call.1} parent=1 // pred_check
      _
    $region19: #{tpu_custom_call.1} parent=1 // pred_check_branch
      %1391 = sbr.rel (0) target = $region21
    $region20: #{tpu_custom_call.1} parent=1 // pred_region
      %s1393 = ssub.s32 256, 256
      %1394 = vsyncadd [#allocation4], %s1393
      %s1396 = sshll.u32 [#allocation7], 4
      %s1397 = int_to_ptr.vmem [resolvable:$true] %s1396
      %1399 = dma.vmem_to_hbm [thread:$0]  %s1397, 256, %s2, [#allocation4]
    $region21: #{tpu_custom_call.1} parent=1 // pred_fallthru
      _
    // Predicated region
    $region22: #{tpu_custom_call.1} parent=1 // pred_check
      _
    $region23: #{tpu_custom_call.1} parent=1 // pred_check_branch
      %1401 = sbr.rel (0) target = $region25
    $region24: #{tpu_custom_call.1} parent=1 // pred_region
      %1402 = dma.done [#allocation4], 256
    $region25: #{tpu_custom_call.1} parent=1 // pred_fallthru
      _
    %1403 = vsyncpa [#allocation3], 1
    %1404 = vsyncpa [#allocation6], 1
    %1405 = vsyncpa [#allocation4], 1

</llo_original>
